<compile_context>
chip_gen: v6e
topology: v6e:2x2x1
jax: 0.10.0
libtpu: 0.0.40
codegen_flags: <defaults>
</compile_context>

<pallas_src>
import jax
import jax.numpy as jnp
from jax.experimental import pallas as pl
from jax.experimental.pallas import tpu as pltpu

_LOG2E = 1.4426950408889634


def fuzzify_kernel(x_ref, mu_ref, coeff_ref, o_ref):
    # x_ref:     (n_in, TB)         crisp inputs, batch on lanes
    # mu_ref:    (n_in, n_mfs)      Gaussian centers (padded slots zeroed)
    # coeff_ref: (n_in, n_mfs)      -log2(e) * mask / (2 * sigma^2); 0 on padded slots
    # o_ref:     (n_in, n_mfs, TB)  fuzzified memberships, batch on lanes
    x = x_ref[...]                                   # (n_in, TB)
    mu = mu_ref[...]                                 # (n_in, n_mfs)
    coeff = coeff_ref[...]                           # (n_in, n_mfs)

    diff = x[:, None, :] - mu[:, :, None]            # (n_in, n_mfs, TB)
    # exp2(diff^2 * coeff): real MF -> gaussian, padded slot (coeff=0) -> 1.0
    o_ref[...] = jnp.exp2((diff * diff) * coeff[:, :, None]).astype(o_ref.dtype)


def _round_up(x, m):
    return ((x + m - 1) // m) * m


def fuzzify_layer(x, mu, sigma, mask, *, batch_tile=32768,
                  out_dtype=jnp.float32, lane_dense_output=False,
                  vmem_budget_bytes=12 * 1024 * 1024):
    """x: (n_cases, n_in); mu/sigma/mask: (n_in, n_mfs).

    Returns (n_cases, n_in, n_mfs) by default, or the kernel-native lane-dense
    (n_in, n_mfs, n_cases) layout if lane_dense_output=True (lets a fused
    downstream consumer skip the batch-major back-transpose).
    """
    n_cases, n_in = x.shape
    n_in_p, n_mfs = mu.shape
    assert n_in == n_in_p, "wrong no. of input values"

    x = x.astype(jnp.float32)
    mu = mu.astype(jnp.float32)
    sigma = sigma.astype(jnp.float32)
    mask = mask.astype(jnp.float32)

    # Fold mask, 1/(2 sigma^2) and log2(e) into one coefficient. Padded slots get
    # coeff = 0 (so exp2(0) = 1), and padded mu entries are zeroed so arbitrary
    # padded parameters can never produce NaN via diff.
    # (If sigma is trainable and can underflow to 0 for a *real* MF, clamp it
    #  upstream; the original torch division has the same 0/0 hazard.)
    coeff = jnp.where(mask > 0.5, -_LOG2E / (2.0 * sigma * sigma), 0.0)
    coeff = coeff.astype(jnp.float32)
    mu = mu * mask

    out_itemsize = jnp.dtype(out_dtype).itemsize

    # Batch (lane) tile: multiple of 128, capped by (a) batch_tile, (b) a VMEM
    # budget for the double-buffered x + output blocks (sublane padding of
    # n_mfs -> roundup(.,8) and n_in -> roundup(.,8) included), and (c) half the
    # batch so the grid has >= 2 steps for v7x megacore sharding.
    sub_mfs = _round_up(n_mfs, 8)
    sub_in = _round_up(n_in, 8)
    bytes_per_col = 2 * (n_in * sub_mfs * out_itemsize) + 2 * (sub_in * 4)
    tb_budget = max((vmem_budget_bytes // bytes_per_col) // 128 * 128, 128)

    tb = min(_round_up(batch_tile, 128), tb_budget)
    tb = min(tb, _round_up(pl.cdiv(n_cases, 2), 128))
    tb = max(tb, 128)
    grid = (pl.cdiv(n_cases, tb),)

    # Lane-dense layout: batch last. (x is tiny vs the output; this transpose is
    # negligible. No explicit padding — Pallas masks the ragged last block.)
    x_t = jnp.transpose(x, (1, 0))                       # (n_in, n_cases)

    out = pl.pallas_call(
        fuzzify_kernel,
        out_shape=jax.ShapeDtypeStruct((n_in, n_mfs, n_cases), out_dtype),
        grid_spec=pltpu.PrefetchScalarGridSpec(
            num_scalar_prefetch=0,
            grid=grid,
            in_specs=[
                pl.BlockSpec((n_in, tb), lambda b: (0, b)),
                pl.BlockSpec((n_in, n_mfs), lambda b: (0, 0)),
                pl.BlockSpec((n_in, n_mfs), lambda b: (0, 0)),
            ],
            out_specs=pl.BlockSpec((n_in, n_mfs, tb), lambda b: (0, 0, b)),
        ),
        compiler_params=pltpu.CompilerParams(
            dimension_semantics=("parallel",),
        ),
    )(x_t, mu, coeff)

    if lane_dense_output:
        return out                                       # (n_in, n_mfs, n_cases)
    # Module-facing layout; layout plumbing outside the kernel. Downstream ANFIS
    # layers should prefer lane_dense_output=True to avoid this full-array copy.
    return jnp.transpose(out, (2, 0, 1))                 # (n_cases, n_in, n_mfs)


if __name__ == "__main__":
    key = jax.random.PRNGKey(0)
    k_x, k_mu, k_sigma = jax.random.split(key, 3)

    n_cases, n_in = 16, 4
    # Per-variable MF counts (before padding), as FuzzifyLayer.__init__ would pad.
    mf_counts = [3, 5, 4, 5]
    max_mfs = max(mf_counts)

    x = jax.random.normal(k_x, (n_cases, n_in), dtype=jnp.float32)

    # Deterministic synthetic Gaussian MF parameters (shape (n_in, max_mfs)).
    mu = jax.random.normal(k_mu, (n_in, max_mfs), dtype=jnp.float32)
    sigma = jnp.abs(jax.random.normal(k_sigma, (n_in, max_mfs),
                                      dtype=jnp.float32)) + 0.5
    # mask[i, m] = 1.0 for a real MF of variable i, 0.0 for a padded slot.
    mask = jnp.asarray(
        [[1.0 if m < mf_counts[i] else 0.0 for m in range(max_mfs)]
         for i in range(n_in)],
        dtype=jnp.float32,
    )

    y = fuzzify_layer(x, mu, sigma, mask)
    y = jax.block_until_ready(y)

    # Pure-JAX reference (mirrors the PyTorch forward semantics exactly).
    diff = x[:, :, None] - mu[None, :, :]
    gauss = jnp.exp(-(diff * diff) / (2.0 * sigma[None] ** 2))
    y_ref = jnp.where(mask[None] > 0.5, gauss, 1.0)

    assert y.shape == (n_cases, n_in, max_mfs)
    assert jnp.allclose(y, y_ref, atol=1e-5, rtol=1e-5)

    # Also sanity-check the lane-dense fast path used by fused consumers.
    y_ld = jax.block_until_ready(
        fuzzify_layer(x, mu, sigma, mask, lane_dense_output=True))
    assert y_ld.shape == (n_in, max_mfs, n_cases)
    assert jnp.allclose(jnp.transpose(y_ld, (2, 0, 1)), y_ref,
                        atol=1e-5, rtol=1e-5)

    print("KERNEL_OK")
</pallas_src>

<mosaic_0001>
module attributes {stable_mosaic.version = 11 : i64} {
  func.func @fuzzify_kernel(%arg0: i32, %arg1: memref<4x128xf32, #tpu.memory_space<vmem>>, %arg2: memref<4x5xf32, #tpu.memory_space<vmem>>, %arg3: memref<4x5xf32, #tpu.memory_space<vmem>>, %arg4: memref<4x5x128xf32, #tpu.memory_space<vmem>>) attributes {dimension_semantics = [#tpu.dimension_semantics<parallel>], iteration_bounds = array<i64: 1>, scalar_prefetch = 0 : i64, scratch_operands = 0 : i64, tpu.core_type = #tpu.core_type<tc>, window_params = [{transform_indices = @transform_0, window_bounds = array<i64: 4, 128>}, {pipeline_mode = #tpu.pipeline_mode<synchronous>, transform_indices = @transform_1, window_bounds = array<i64: 4, 5>}, {pipeline_mode = #tpu.pipeline_mode<synchronous>, transform_indices = @transform_2, window_bounds = array<i64: 4, 5>}, {transform_indices = @transform_3, window_bounds = array<i64: 4, 5, 128>}]} {
    %c0 = arith.constant 0 : index
    %c0_0 = arith.constant 0 : index
    %0 = vector.load %arg1[%c0, %c0_0] : memref<4x128xf32, #tpu.memory_space<vmem>>, vector<4x128xf32>
    %c0_1 = arith.constant 0 : index
    %c0_2 = arith.constant 0 : index
    %1 = vector.load %arg2[%c0_1, %c0_2] : memref<4x5xf32, #tpu.memory_space<vmem>>, vector<4x5xf32>
    %c0_3 = arith.constant 0 : index
    %c0_4 = arith.constant 0 : index
    %2 = vector.load %arg3[%c0_3, %c0_4] : memref<4x5xf32, #tpu.memory_space<vmem>>, vector<4x5xf32>
    %3 = vector.shape_cast %0 : vector<4x128xf32> to vector<4x1x128xf32>
    %4 = vector.shape_cast %1 : vector<4x5xf32> to vector<4x5x1xf32>
    %5 = vector.broadcast %3 : vector<4x1x128xf32> to vector<4x5x128xf32>
    %6 = vector.broadcast %4 : vector<4x5x1xf32> to vector<4x5x128xf32>
    %7 = arith.subf %5, %6 : vector<4x5x128xf32>
    %8 = arith.mulf %7, %7 : vector<4x5x128xf32>
    %9 = vector.shape_cast %2 : vector<4x5xf32> to vector<4x5x1xf32>
    %10 = vector.broadcast %9 : vector<4x5x1xf32> to vector<4x5x128xf32>
    %11 = arith.mulf %8, %10 : vector<4x5x128xf32>
    %12 = math.exp2 %11 : vector<4x5x128xf32>
    %c0_5 = arith.constant 0 : index
    %c0_6 = arith.constant 0 : index
    %c0_7 = arith.constant 0 : index
    %13 = vector.load %arg4[%c0_5, %c0_6, %c0_7] : memref<4x5x128xf32, #tpu.memory_space<vmem>>, vector<4x5x128xf32>
    tpu.vector_store %arg4[%c0_5, %c0_6, %c0_7], %12 {strides = array<i32>} : memref<4x5x128xf32, #tpu.memory_space<vmem>>, vector<4x5x128xf32>,
    return
  }
  func.func @transform_0(%arg0: i32) -> (i32, i32) {
    %c0_i32 = arith.constant 0 : i32
    %c0_i32_0 = arith.constant 0 : i32
    return %c0_i32, %arg0 : i32, i32
  }
  func.func @transform_1(%arg0: i32) -> (i32, i32) {
    %c0_i32 = arith.constant 0 : i32
    %c0_i32_0 = arith.constant 0 : i32
    %c0_i32_1 = arith.constant 0 : i32
    return %c0_i32, %c0_i32_0 : i32, i32
  }
  func.func @transform_2(%arg0: i32) -> (i32, i32) {
    %c0_i32 = arith.constant 0 : i32
    %c0_i32_0 = arith.constant 0 : i32
    %c0_i32_1 = arith.constant 0 : i32
    return %c0_i32, %c0_i32_0 : i32, i32
  }
  func.func @transform_3(%arg0: i32) -> (i32, i32, i32) {
    %c0_i32 = arith.constant 0 : i32
    %c0_i32_0 = arith.constant 0 : i32
    %c0_i32_1 = arith.constant 0 : i32
    return %c0_i32, %c0_i32_0, %arg0 : i32, i32, i32
  }
}

</mosaic_0001>

<llo_original>
// kernel: tpu_custom_call.1
$region0: #{tpu_custom_call.1}
  #allocation0 [shape = 'u32[]', space=smem, size = 0x4, offset = 0x4, fixed_abs, tag = 'smem constant byte address 0x4 - core index']
  #allocation1 [shape = 'u32[144,128]{1,0:T(1,128)}', space=vmem, size = 0x12000, scoped, tag = 'internal scratch']
  %s0 = inlined_call_operand.hbm [shape: f32[4,16], index: 0, kind: input, shape index: {}]
  %s1 = inlined_call_operand.hbm [shape: f32[4,5], index: 1, kind: input, shape index: {}]
  %s2 = inlined_call_operand.hbm [shape: f32[4,5], index: 2, kind: input, shape index: {}]
  %s3 = inlined_call_operand.vmem [shape: f32[4,5,16], index: 3, kind: output, shape index: {}]
  %s4 = sld [smem:[#allocation0]]
  $region34: #{tpu_custom_call.1} parent=0
    _
  %s6 = ssub.s32 1, %s4
  %s7 = scalar_select 0, %s6, %s4
  $region1: #{tpu_custom_call.1} parent=0
    #allocation2 [shape = 'u8[2048]{0}', space=vmem, size = 0x800, scoped, tag = 'input window, operand 0, single buffered']
    #allocation3 [shape = 's32[1]{0}', space=sflag, size = 0x4, scoped, tag = 'scoped memory for tpu_custom_call.1']
    #allocation4 [shape = 'u8[2048]{0}', space=vmem, size = 0x800, scoped, tag = 'input window, operand 1, single buffered']
    #allocation5 [shape = 's32[1]{0}', space=sflag, size = 0x4, scoped, tag = 'scoped memory for tpu_custom_call.1']
    #allocation6 [shape = 'u8[2048]{0}', space=vmem, size = 0x800, scoped, tag = 'input window, operand 2, single buffered']
    %8 = vsyncpa [#allocation3], 0
    %9 = vsyncpa [#allocation5], 0
    // Predicated region
    $region2: #{tpu_custom_call.1} parent=1 // pred_check
      _
    $region3: #{tpu_custom_call.1} parent=1 // pred_check_branch
      %11 = sbr.rel (0) target = $region5
    $region4: #{tpu_custom_call.1} parent=1 // pred_region
      %s13 = ssub.s32 64, 64
      %14 = vsyncadd [#allocation3], %s13
      %s16 = sshll.u32 [#allocation2], 4
      %s17 = int_to_ptr.vmem [resolvable:$true] %s16
      %19 = dma.hbm_to_vmem [thread:$0]  %s0, 64, %s17, [#allocation3]
    $region5: #{tpu_custom_call.1} parent=1 // pred_fallthru
      _
    // Predicated region
    $region6: #{tpu_custom_call.1} parent=1 // pred_check
      _
    $region7: #{tpu_custom_call.1} parent=1 // pred_check_branch
      %21 = sbr.rel (0) target = $region9
    $region8: #{tpu_custom_call.1} parent=1 // pred_region
      %s23 = ssub.s32 64, 64
      %24 = vsyncadd [#allocation5], %s23
      %s26 = sshll.u32 [#allocation4], 4
      %s27 = int_to_ptr.vmem [resolvable:$true] %s26
      %29 = dma.hbm_to_vmem [thread:$0]  %s1, 64, %s27, [#allocation5]
    $region9: #{tpu_custom_call.1} parent=1 // pred_fallthru
      _
    // Predicated region
    $region10: #{tpu_custom_call.1} parent=1 // pred_check
      _
    $region11: #{tpu_custom_call.1} parent=1 // pred_check_branch
      %31 = sbr.rel (0) target = $region13
    $region12: #{tpu_custom_call.1} parent=1 // pred_region
      %s33 = ssub.s32 64, 64
      %34 = vsyncadd [#allocation5], %s33
      %s36 = sshll.u32 [#allocation6], 4
      %s37 = int_to_ptr.vmem [resolvable:$true] %s36
      %39 = dma.hbm_to_vmem [thread:$0]  %s2, 64, %s37, [#allocation5]
    $region13: #{tpu_custom_call.1} parent=1 // pred_fallthru
      _
    // Predicated region
    $region14: #{tpu_custom_call.1} parent=1 // pred_check
      _
    $region15: #{tpu_custom_call.1} parent=1 // pred_check_branch
      %41 = sbr.rel (0) target = $region17
    $region16: #{tpu_custom_call.1} parent=1 // pred_region
      %42 = dma.done [#allocation3], 64
    $region17: #{tpu_custom_call.1} parent=1 // pred_fallthru
      _
    // Predicated region
    $region18: #{tpu_custom_call.1} parent=1 // pred_check
      _
    $region19: #{tpu_custom_call.1} parent=1 // pred_check_branch
      %44 = sbr.rel (0) target = $region21
    $region20: #{tpu_custom_call.1} parent=1 // pred_region
      %45 = dma.done [#allocation5], 64
    $region21: #{tpu_custom_call.1} parent=1 // pred_fallthru
      _
    // Predicated region
    $region22: #{tpu_custom_call.1} parent=1 // pred_check
      _
    $region23: #{tpu_custom_call.1} parent=1 // pred_check_branch
      %47 = sbr.rel (0) target = $region25
    $region24: #{tpu_custom_call.1} parent=1 // pred_region
      %48 = dma.done [#allocation5], 64
    $region25: #{tpu_custom_call.1} parent=1 // pred_fallthru
      _
    %v49 = vld [vmem:[#allocation2] sm:$0xf]
    %v50 = vld [vmem:[#allocation4] sm:$0xf]
    %v51 = vld [vmem:[#allocation6] sm:$0xf]
    %v54 = vunpack.c.l.s4 1966171168
    %v55 = vunpack.c.0.s8 %v54
    %v56 = vlaneseq
    %v57 = vshrl.u32 %v56, 7
    %v58 = vsub.s32 %v55, %v57
    %v59 = vrot.slane %v49, %v58
    %v60 = vcombine.high %v59, %v59
    %v62 = vunpack.c.l.s4 1966171168
    %v63 = vunpack.c.0.s8 %v62
    %v64 = vlaneseq
    %v65 = vshrl.u32 %v64, 7
    %v66 = vsub.s32 %v63, %v65
    %v67 = vrot.slane %v59, %v66
    %v69 = vunpack.c.l.s4 1966171168
    %v70 = vunpack.c.0.s8 %v69
    %v71 = vlaneseq
    %v72 = vshrl.u32 %v71, 7
    %v73 = vsub.s32 %v70, %v72
    %v74 = vrot.slane %v60, %v73
    %v75 = vcombine.high %v67, %v67
    %v76 = vcombine.high %v74, %v74
    %v77 = vlaneseq
    %v78 = vshrl.u32 %v77, 7
    %v79 = vsub.s32 0, %v78
    %v80 = vrot.slane %v50, %v79
    %82 = vbcast.lane.b32.xlu0 %v80, 256
    %v83 = vpop.permute.xlu0 %82
    %v84 = vlaneseq
    %v85 = vshrl.u32 %v84, 7
    %v86 = vsub.s32 1, %v85
    %v87 = vrot.slane %v50, %v86
    %89 = vbcast.lane.b32.xlu0 %v87, 256
    %v90 = vpop.permute.xlu0 %89
    %v91 = vlaneseq
    %v92 = vshrl.u32 %v91, 7
    %v93 = vsub.s32 2, %v92
    %v94 = vrot.slane %v50, %v93
    %96 = vbcast.lane.b32.xlu0 %v94, 256
    %v97 = vpop.permute.xlu0 %96
    %v98 = vlaneseq
    %v99 = vshrl.u32 %v98, 7
    %v100 = vsub.s32 3, %v99
    %v101 = vrot.slane %v50, %v100
    %103 = vbcast.lane.b32.xlu0 %v101, 256
    %v104 = vpop.permute.xlu0 %103
    %v105 = vlaneseq
    %v106 = vshrl.u32 %v105, 7
    %v107 = vsub.s32 0, %v106
    %v108 = vrot.slane %v67, %v107
    %v109 = vlaneseq
    %v110 = vshrl.u32 %v109, 7
    %v111 = vsub.s32 0, %v110
    %v112 = vrot.slane %v74, %v111
    %v113 = vlaneseq
    %v114 = vshrl.u32 %v113, 7
    %v115 = vsub.s32 0, %v114
    %v116 = vrot.slane %v75, %v115
    %v117 = vlaneseq
    %v118 = vshrl.u32 %v117, 7
    %v119 = vsub.s32 0, %v118
    %v120 = vrot.slane %v76, %v119
    %v125 = vsub.f32 %v108, %v83
    %v126 = vsub.f32 %v112, %v90
    %v127 = vsub.f32 %v116, %v97
    %v128 = vsub.f32 %v120, %v104
    %v129 = vmul.f32 %v125, %v125
    %v130 = vmul.f32 %v126, %v126
    %v131 = vmul.f32 %v127, %v127
    %v132 = vmul.f32 %v128, %v128
    %v133 = vlaneseq
    %v134 = vshrl.u32 %v133, 7
    %v135 = vsub.s32 0, %v134
    %v136 = vrot.slane %v51, %v135
    %138 = vbcast.lane.b32.xlu0 %v136, 256
    %v139 = vpop.permute.xlu0 %138
    %v140 = vlaneseq
    %v141 = vshrl.u32 %v140, 7
    %v142 = vsub.s32 1, %v141
    %v143 = vrot.slane %v51, %v142
    %145 = vbcast.lane.b32.xlu0 %v143, 256
    %v146 = vpop.permute.xlu0 %145
    %v147 = vlaneseq
    %v148 = vshrl.u32 %v147, 7
    %v149 = vsub.s32 2, %v148
    %v150 = vrot.slane %v51, %v149
    %152 = vbcast.lane.b32.xlu0 %v150, 256
    %v153 = vpop.permute.xlu0 %152
    %v154 = vlaneseq
    %v155 = vshrl.u32 %v154, 7
    %v156 = vsub.s32 3, %v155
    %v157 = vrot.slane %v51, %v156
    %159 = vbcast.lane.b32.xlu0 %v157, 256
    %v160 = vpop.permute.xlu0 %159
    %v161 = vmul.f32 %v129, %v139
    %v162 = vmul.f32 %v130, %v146
    %v163 = vmul.f32 %v131, %v153
    %v164 = vmul.f32 %v132, %v160
    %v165 = vpow.pop %v161
    %v166 = vpow.pop %v162
    %v167 = vpow.pop %v163
    %v168 = vpow.pop %v164
    %169 = vst [vmem:[%s3] sm:$0x1f] %v165
    %170 = vst [vmem:[%s3 + $0x8] sm:$0x1f] %v166
    %171 = vst [vmem:[%s3 + $0x10] sm:$0x1f] %v167
    %172 = vst [vmem:[%s3 + $0x18] sm:$0x1f] %v168
    // Predicated region
    $region26: #{tpu_custom_call.1} parent=1 // pred_check
      _
    $region27: #{tpu_custom_call.1} parent=1 // pred_check_branch
      %174 = sbr.rel (0) target = $region29
    $region28: #{tpu_custom_call.1} parent=1 // pred_region
      _
    $region29: #{tpu_custom_call.1} parent=1 // pred_fallthru
      _
    // Predicated region
    $region30: #{tpu_custom_call.1} parent=1 // pred_check
      _
    $region31: #{tpu_custom_call.1} parent=1 // pred_check_branch
      %176 = sbr.rel (0) target = $region33
    $region32: #{tpu_custom_call.1} parent=1 // pred_region
      _
    $region33: #{tpu_custom_call.1} parent=1 // pred_fallthru
      _
    %177 = vsyncpa [#allocation3], 1
    %178 = vsyncpa [#allocation5], 1

</llo_original>
